<compile_context>
chip_gen: v7x
topology: tpu7x:2x2x1
jax: 0.10.0
libtpu: 0.0.40
codegen_flags: <defaults>
</compile_context>

<pallas_src>
import jax
import jax.numpy as jnp
from jax.experimental import pallas as pl
from jax.experimental.pallas import tpu as pltpu

_LANE = 128
_SUBLANE = 8
_VMEM_LIMIT_BYTES = 48 * 1024 * 1024   # < v7x 64 MiB physical, > v5e 16 MiB default
_VMEM_TILE_BUDGET = 24 * 1024 * 1024   # per-step buffer budget used to size TB


def _round_up(x, m):
    return (x + m - 1) // m * m


def _choose_batch_tile(B, input_dim, out_dim, batch_tile):
    """Pick a batch tile that (a) fits the VMEM budget, (b) leaves >=2 grid
    steps for medium/large B (v7x megacore), (c) is a multiple of 8."""
    bytes_per_row = 4 * (
        2 * _round_up(max(input_dim, 1), _LANE)   # x block, double-buffered
        + 2 * _round_up(max(out_dim, 1), _LANE)   # out block, double-buffered
        + 4 * _LANE                               # f32 temporaries: x cast, h1, h2, h3
    )
    tb = min(batch_tile, max(_SUBLANE, _VMEM_TILE_BUDGET // bytes_per_row))
    # Aim for >= 2 grid steps so both v7x TensorCores get work.
    tb = min(tb, _round_up(pl.cdiv(B, 2), _SUBLANE))
    tb = min(tb, _round_up(B, _SUBLANE))
    return max(_SUBLANE, _round_up(tb, _SUBLANE))


def _mlp_decoder_y_kernel(x_ref,
                          w1_ref, b1_ref,
                          w2_ref, b2_ref,
                          w3_ref, b3_ref,
                          w4_ref, b4_ref,
                          o_ref):
    """Whole 4-layer MLP for one batch tile, entirely in VMEM.

    x_ref:  (TB, input_dim)
    wN_ref: (in_N, out_N), bN_ref: (1, out_N)
    o_ref:  (TB, out_dim)
    """
    h = x_ref[...].astype(jnp.float32)

    h = jnp.tanh(
        jnp.dot(h, w1_ref[...], preferred_element_type=jnp.float32) + b1_ref[...])
    h = jnp.tanh(
        jnp.dot(h, w2_ref[...], preferred_element_type=jnp.float32) + b2_ref[...])
    h = jnp.tanh(
        jnp.dot(h, w3_ref[...], preferred_element_type=jnp.float32) + b3_ref[...])
    out = jnp.dot(h, w4_ref[...], preferred_element_type=jnp.float32) + b4_ref[...]

    o_ref[...] = out.astype(o_ref.dtype)


def mlp_decoder_y_forward(z, params, *, out_dim, batch_tile=4096):
    """Pallas implementation of MLPDecoder_y.forward.

    z may have any trailing shape; it is flattened to (B, input_dim) exactly
    like z.view(z.size(0), -1) in the PyTorch module.
    """
    B = z.shape[0]
    x = z.reshape(B, -1)                     # glue: flatten (plain JAX)
    input_dim = x.shape[1]

    (w1, b1), (w2, b2), (w3, b3), (w4, b4) = params
    assert w1.shape[0] == input_dim and w4.shape[1] == out_dim

    TB = _choose_batch_tile(B, input_dim, out_dim, batch_tile)
    grid = (pl.cdiv(B, TB),)                 # partial last block handled by Pallas

    # Full-array blocks for the (tiny) weights/biases; constant index_map
    # means they are DMA'd into VMEM once and reused across all grid steps.
    def full_spec(a):
        return pl.BlockSpec(a.shape, lambda i: (0,) * a.ndim)

    out = pl.pallas_call(
        _mlp_decoder_y_kernel,
        out_shape=jax.ShapeDtypeStruct((B, out_dim), z.dtype),
        grid=grid,
        in_specs=[
            pl.BlockSpec((TB, input_dim), lambda i: (i, 0)),
            full_spec(w1), full_spec(b1),
            full_spec(w2), full_spec(b2),
            full_spec(w3), full_spec(b3),
            full_spec(w4), full_spec(b4),
        ],
        out_specs=pl.BlockSpec((TB, out_dim), lambda i: (i, 0)),
        compiler_params=pltpu.CompilerParams(
            dimension_semantics=("parallel",),
            vmem_limit_bytes=_VMEM_LIMIT_BYTES),
    )(x, w1, b1, w2, b2, w3, b3, w4, b4)

    # h.view(B, out_dim): already the right shape, no post-slice needed.
    return out


def init_params(key, input_dim, out_dim):
    """Deterministic synthetic parameters matching nn.Linear shapes.

    PyTorch Linear(in, out) holds weight (out, in); we store the transpose
    (in, out) so the kernel can do x @ W + b. Init mimics PyTorch's
    U(-1/sqrt(in), 1/sqrt(in)).
    """
    dims = [(input_dim, 15), (15, 15), (15, 10), (10, out_dim)]
    params = []
    for (din, dout) in dims:
        key, kw, kb = jax.random.split(key, 3)
        bound = 1.0 / jnp.sqrt(jnp.float32(din))
        w = jax.random.uniform(kw, (din, dout), jnp.float32, -bound, bound)
        b = jax.random.uniform(kb, (1, dout), jnp.float32, -bound, bound)
        params.append((w, b))
    return params


def reference_forward(z, params, out_dim):
    """Plain-JAX reference for correctness checking."""
    h = z.reshape(z.shape[0], -1)
    (w1, b1), (w2, b2), (w3, b3), (w4, b4) = params
    h = jnp.tanh(h @ w1 + b1)
    h = jnp.tanh(h @ w2 + b2)
    h = jnp.tanh(h @ w3 + b3)
    h = h @ w4 + b4
    return h.reshape(z.shape[0], out_dim)


if __name__ == "__main__":
    key = jax.random.PRNGKey(0)
    k_z, k_p, k_z2 = jax.random.split(key, 3)

    input_dim = 32   # latent dim fed to the decoder
    out_dim = 10     # number of target classes / outputs
    params = init_params(k_p, input_dim, out_dim)

    # Case 1: small batch (single grid step, whole batch in one tile).
    batch = 8
    z = jax.random.normal(k_z, (batch, input_dim), jnp.float32)
    out = mlp_decoder_y_forward(z, params, out_dim=out_dim)
    out = jax.block_until_ready(out)
    ref = reference_forward(z, params, out_dim)
    assert out.shape == (batch, out_dim)
    assert jnp.allclose(out, ref, atol=1e-5, rtol=1e-5), "mismatch vs reference (small batch)"

    # Case 2: ragged batch exercising the multi-step grid + partial last block.
    batch2 = 300
    z2 = jax.random.normal(k_z2, (batch2, input_dim), jnp.float32)
    out2 = mlp_decoder_y_forward(z2, params, out_dim=out_dim)
    out2 = jax.block_until_ready(out2)
    ref2 = reference_forward(z2, params, out_dim)
    assert out2.shape == (batch2, out_dim)
    assert jnp.allclose(out2, ref2, atol=1e-5, rtol=1e-5), "mismatch vs reference (tiled batch)"

    print("KERNEL_OK")
</pallas_src>

<mosaic_0001>
module attributes {stable_mosaic.version = 11 : i64} {
  func.func @_mlp_decoder_y_kernel(%arg0: i32, %arg1: memref<8x32xf32, #tpu.memory_space<vmem>>, %arg2: memref<32x15xf32, #tpu.memory_space<vmem>>, %arg3: memref<1x15xf32, #tpu.memory_space<vmem>>, %arg4: memref<15x15xf32, #tpu.memory_space<vmem>>, %arg5: memref<1x15xf32, #tpu.memory_space<vmem>>, %arg6: memref<15x10xf32, #tpu.memory_space<vmem>>, %arg7: memref<1x10xf32, #tpu.memory_space<vmem>>, %arg8: memref<10x10xf32, #tpu.memory_space<vmem>>, %arg9: memref<1x10xf32, #tpu.memory_space<vmem>>, %arg10: memref<8x10xf32, #tpu.memory_space<vmem>>) attributes {dimension_semantics = [#tpu.dimension_semantics<parallel>], iteration_bounds = array<i64: 1>, scalar_prefetch = 0 : i64, scratch_operands = 0 : i64, tpu.core_type = #tpu.core_type<tc>, window_params = [{transform_indices = @transform_0, window_bounds = array<i64: 8, 32>}, {pipeline_mode = #tpu.pipeline_mode<synchronous>, transform_indices = @transform_1, window_bounds = array<i64: 32, 15>}, {pipeline_mode = #tpu.pipeline_mode<synchronous>, transform_indices = @transform_2, window_bounds = array<i64: 1, 15>}, {pipeline_mode = #tpu.pipeline_mode<synchronous>, transform_indices = @transform_3, window_bounds = array<i64: 15, 15>}, {pipeline_mode = #tpu.pipeline_mode<synchronous>, transform_indices = @transform_4, window_bounds = array<i64: 1, 15>}, {pipeline_mode = #tpu.pipeline_mode<synchronous>, transform_indices = @transform_5, window_bounds = array<i64: 15, 10>}, {pipeline_mode = #tpu.pipeline_mode<synchronous>, transform_indices = @transform_6, window_bounds = array<i64: 1, 10>}, {pipeline_mode = #tpu.pipeline_mode<synchronous>, transform_indices = @transform_7, window_bounds = array<i64: 10, 10>}, {pipeline_mode = #tpu.pipeline_mode<synchronous>, transform_indices = @transform_8, window_bounds = array<i64: 1, 10>}, {transform_indices = @transform_9, window_bounds = array<i64: 8, 10>}]} {
    %c0 = arith.constant 0 : index
    %c0_0 = arith.constant 0 : index
    %0 = vector.load %arg1[%c0, %c0_0] : memref<8x32xf32, #tpu.memory_space<vmem>>, vector<8x32xf32>
    %c0_1 = arith.constant 0 : index
    %c0_2 = arith.constant 0 : index
    %1 = vector.load %arg2[%c0_1, %c0_2] : memref<32x15xf32, #tpu.memory_space<vmem>>, vector<32x15xf32>
    %cst = arith.constant dense<0.000000e+00> : vector<8x15xf32>
    %2 = tpu.matmul %0, %1, %cst {dimension_numbers = #tpu.dot_dimension_numbers<[1], [0], [0], [1], [0, 0, 1, 1], [], []>} : vector<8x32xf32>, vector<32x15xf32>, vector<8x15xf32> -> vector<8x15xf32>
    %c0_3 = arith.constant 0 : index
    %c0_4 = arith.constant 0 : index
    %3 = vector.load %arg3[%c0_3, %c0_4] : memref<1x15xf32, #tpu.memory_space<vmem>>, vector<1x15xf32>
    %4 = vector.broadcast %3 : vector<1x15xf32> to vector<8x15xf32>
    %5 = arith.addf %2, %4 : vector<8x15xf32>
    %6 = math.tanh %5 : vector<8x15xf32>
    %c0_5 = arith.constant 0 : index
    %c0_6 = arith.constant 0 : index
    %7 = vector.load %arg4[%c0_5, %c0_6] : memref<15x15xf32, #tpu.memory_space<vmem>>, vector<15x15xf32>
    %cst_7 = arith.constant dense<0.000000e+00> : vector<8x15xf32>
    %8 = tpu.matmul %6, %7, %cst_7 {dimension_numbers = #tpu.dot_dimension_numbers<[1], [0], [0], [1], [0, 0, 1, 1], [], []>} : vector<8x15xf32>, vector<15x15xf32>, vector<8x15xf32> -> vector<8x15xf32>
    %c0_8 = arith.constant 0 : index
    %c0_9 = arith.constant 0 : index
    %9 = vector.load %arg5[%c0_8, %c0_9] : memref<1x15xf32, #tpu.memory_space<vmem>>, vector<1x15xf32>
    %10 = vector.broadcast %9 : vector<1x15xf32> to vector<8x15xf32>
    %11 = arith.addf %8, %10 : vector<8x15xf32>
    %12 = math.tanh %11 : vector<8x15xf32>
    %c0_10 = arith.constant 0 : index
    %c0_11 = arith.constant 0 : index
    %13 = vector.load %arg6[%c0_10, %c0_11] : memref<15x10xf32, #tpu.memory_space<vmem>>, vector<15x10xf32>
    %cst_12 = arith.constant dense<0.000000e+00> : vector<8x10xf32>
    %14 = tpu.matmul %12, %13, %cst_12 {dimension_numbers = #tpu.dot_dimension_numbers<[1], [0], [0], [1], [0, 0, 1, 1], [], []>} : vector<8x15xf32>, vector<15x10xf32>, vector<8x10xf32> -> vector<8x10xf32>
    %c0_13 = arith.constant 0 : index
    %c0_14 = arith.constant 0 : index
    %15 = vector.load %arg7[%c0_13, %c0_14] : memref<1x10xf32, #tpu.memory_space<vmem>>, vector<1x10xf32>
    %16 = vector.broadcast %15 : vector<1x10xf32> to vector<8x10xf32>
    %17 = arith.addf %14, %16 : vector<8x10xf32>
    %18 = math.tanh %17 : vector<8x10xf32>
    %c0_15 = arith.constant 0 : index
    %c0_16 = arith.constant 0 : index
    %19 = vector.load %arg8[%c0_15, %c0_16] : memref<10x10xf32, #tpu.memory_space<vmem>>, vector<10x10xf32>
    %cst_17 = arith.constant dense<0.000000e+00> : vector<8x10xf32>
    %20 = tpu.matmul %18, %19, %cst_17 {dimension_numbers = #tpu.dot_dimension_numbers<[1], [0], [0], [1], [0, 0, 1, 1], [], []>} : vector<8x10xf32>, vector<10x10xf32>, vector<8x10xf32> -> vector<8x10xf32>
    %c0_18 = arith.constant 0 : index
    %c0_19 = arith.constant 0 : index
    %21 = vector.load %arg9[%c0_18, %c0_19] : memref<1x10xf32, #tpu.memory_space<vmem>>, vector<1x10xf32>
    %22 = vector.broadcast %21 : vector<1x10xf32> to vector<8x10xf32>
    %23 = arith.addf %20, %22 : vector<8x10xf32>
    %c0_20 = arith.constant 0 : index
    %c0_21 = arith.constant 0 : index
    %24 = vector.load %arg10[%c0_20, %c0_21] : memref<8x10xf32, #tpu.memory_space<vmem>>, vector<8x10xf32>
    tpu.vector_store %arg10[%c0_20, %c0_21], %23 {strides = array<i32>} : memref<8x10xf32, #tpu.memory_space<vmem>>, vector<8x10xf32>,
    return
  }
  func.func @transform_0(%arg0: i32) -> (i32, i32) {
    %c0_i32 = arith.constant 0 : i32
    %c0_i32_0 = arith.constant 0 : i32
    return %arg0, %c0_i32 : i32, i32
  }
  func.func @transform_1(%arg0: i32) -> (i32, i32) {
    %c0_i32 = arith.constant 0 : i32
    %c0_i32_0 = arith.constant 0 : i32
    %c0_i32_1 = arith.constant 0 : i32
    return %c0_i32, %c0_i32_0 : i32, i32
  }
  func.func @transform_2(%arg0: i32) -> (i32, i32) {
    %c0_i32 = arith.constant 0 : i32
    %c0_i32_0 = arith.constant 0 : i32
    %c0_i32_1 = arith.constant 0 : i32
    return %c0_i32, %c0_i32_0 : i32, i32
  }
  func.func @transform_3(%arg0: i32) -> (i32, i32) {
    %c0_i32 = arith.constant 0 : i32
    %c0_i32_0 = arith.constant 0 : i32
    %c0_i32_1 = arith.constant 0 : i32
    return %c0_i32, %c0_i32_0 : i32, i32
  }
  func.func @transform_4(%arg0: i32) -> (i32, i32) {
    %c0_i32 = arith.constant 0 : i32
    %c0_i32_0 = arith.constant 0 : i32
    %c0_i32_1 = arith.constant 0 : i32
    return %c0_i32, %c0_i32_0 : i32, i32
  }
  func.func @transform_5(%arg0: i32) -> (i32, i32) {
    %c0_i32 = arith.constant 0 : i32
    %c0_i32_0 = arith.constant 0 : i32
    %c0_i32_1 = arith.constant 0 : i32
    return %c0_i32, %c0_i32_0 : i32, i32
  }
  func.func @transform_6(%arg0: i32) -> (i32, i32) {
    %c0_i32 = arith.constant 0 : i32
    %c0_i32_0 = arith.constant 0 : i32
    %c0_i32_1 = arith.constant 0 : i32
    return %c0_i32, %c0_i32_0 : i32, i32
  }
  func.func @transform_7(%arg0: i32) -> (i32, i32) {
    %c0_i32 = arith.constant 0 : i32
    %c0_i32_0 = arith.constant 0 : i32
    %c0_i32_1 = arith.constant 0 : i32
    return %c0_i32, %c0_i32_0 : i32, i32
  }
  func.func @transform_8(%arg0: i32) -> (i32, i32) {
    %c0_i32 = arith.constant 0 : i32
    %c0_i32_0 = arith.constant 0 : i32
    %c0_i32_1 = arith.constant 0 : i32
    return %c0_i32, %c0_i32_0 : i32, i32
  }
  func.func @transform_9(%arg0: i32) -> (i32, i32) {
    %c0_i32 = arith.constant 0 : i32
    %c0_i32_0 = arith.constant 0 : i32
    return %arg0, %c0_i32 : i32, i32
  }
}

</mosaic_0001>

<llo_original>
// kernel: tpu_custom_call.1
$region0: #{tpu_custom_call.1}
  #allocation0 [shape = 'u32[]', space=smem, size = 0x4, offset = 0x4, fixed_abs, tag = 'smem constant byte address 0x4 - core index']
  #allocation1 [shape = 'u32[144,128]{1,0:T(1,128)}', space=vmem, size = 0x12000, scoped, tag = 'internal scratch']
  %s0 = inlined_call_operand.hbm [shape: f32[8,32], index: 0, kind: input, shape index: {}]
  %s1 = inlined_call_operand.vmem [shape: f32[32,15], index: 1, kind: input, shape index: {}]
  %s2 = inlined_call_operand.vmem [shape: f32[1,15], index: 2, kind: input, shape index: {}]
  %s3 = inlined_call_operand.vmem [shape: f32[15,15], index: 3, kind: input, shape index: {}]
  %s4 = inlined_call_operand.vmem [shape: f32[1,15], index: 4, kind: input, shape index: {}]
  %s5 = inlined_call_operand.vmem [shape: f32[15,10], index: 5, kind: input, shape index: {}]
  %s6 = inlined_call_operand.vmem [shape: f32[1,10], index: 6, kind: input, shape index: {}]
  %s7 = inlined_call_operand.vmem [shape: f32[10,10], index: 7, kind: input, shape index: {}]
  %s8 = inlined_call_operand.vmem [shape: f32[1,10], index: 8, kind: input, shape index: {}]
  %s9 = inlined_call_operand.hbm [shape: f32[8,10], index: 9, kind: output, shape index: {}]
  %s10 = sld [smem:[#allocation0]]
  $region50: #{tpu_custom_call.1} parent=0
    _
  %s12 = ssub.s32 1, %s10
  %s13 = scalar_select 0, %s12, %s10
  $region1: #{tpu_custom_call.1} parent=0
    #allocation2 [shape = 'u8[4096]{0}', space=vmem, size = 0x1000, scoped, tag = 'input window, operand 0, single buffered']
    #allocation3 [shape = 's32[1]{0}', space=sflag, size = 0x4, scoped, tag = 'scoped memory for tpu_custom_call.1']
    #allocation4 [shape = 's32[1]{0}', space=sflag, size = 0x4, scoped, tag = 'scoped memory for tpu_custom_call.1']
    #allocation5 [shape = 'u8[4096]{0}', space=vmem, size = 0x1000, scoped, tag = 'output window, operand 0, single buffered']
    %14 = vsyncpa [#allocation3], 0
    %15 = vsyncpa [#allocation4], 0
    // Predicated region
    $region2: #{tpu_custom_call.1} parent=1 // pred_check
      _
    $region3: #{tpu_custom_call.1} parent=1 // pred_check_branch
      %17 = sbr.rel (0) target = $region5
    $region4: #{tpu_custom_call.1} parent=1 // pred_region
      %s19 = ssub.s32 128, 128
      %20 = vsyncadd [#allocation3], %s19
      %s22 = sshll.u32 [#allocation2], 4
      %s23 = int_to_ptr.vmem [resolvable:$true] %s22
      %25 = dma.hbm_to_vmem [thread:$0]  %s0, 128, %s23, [#allocation3]
    $region5: #{tpu_custom_call.1} parent=1 // pred_fallthru
      _
    // Predicated region
    $region6: #{tpu_custom_call.1} parent=1 // pred_check
      _
    $region7: #{tpu_custom_call.1} parent=1 // pred_check_branch
      %27 = sbr.rel (0) target = $region9
    $region8: #{tpu_custom_call.1} parent=1 // pred_region
      _
    $region9: #{tpu_custom_call.1} parent=1 // pred_fallthru
      _
    // Predicated region
    $region10: #{tpu_custom_call.1} parent=1 // pred_check
      _
    $region11: #{tpu_custom_call.1} parent=1 // pred_check_branch
      %29 = sbr.rel (0) target = $region13
    $region12: #{tpu_custom_call.1} parent=1 // pred_region
      _
    $region13: #{tpu_custom_call.1} parent=1 // pred_fallthru
      _
    // Predicated region
    $region14: #{tpu_custom_call.1} parent=1 // pred_check
      _
    $region15: #{tpu_custom_call.1} parent=1 // pred_check_branch
      %31 = sbr.rel (0) target = $region17
    $region16: #{tpu_custom_call.1} parent=1 // pred_region
      _
    $region17: #{tpu_custom_call.1} parent=1 // pred_fallthru
      _
    // Predicated region
    $region18: #{tpu_custom_call.1} parent=1 // pred_check
      _
    $region19: #{tpu_custom_call.1} parent=1 // pred_check_branch
      %33 = sbr.rel (0) target = $region21
    $region20: #{tpu_custom_call.1} parent=1 // pred_region
      _
    $region21: #{tpu_custom_call.1} parent=1 // pred_fallthru
      _
    // Predicated region
    $region22: #{tpu_custom_call.1} parent=1 // pred_check
      _
    $region23: #{tpu_custom_call.1} parent=1 // pred_check_branch
      %35 = sbr.rel (0) target = $region25
    $region24: #{tpu_custom_call.1} parent=1 // pred_region
      _
    $region25: #{tpu_custom_call.1} parent=1 // pred_fallthru
      _
    // Predicated region
    $region26: #{tpu_custom_call.1} parent=1 // pred_check
      _
    $region27: #{tpu_custom_call.1} parent=1 // pred_check_branch
      %37 = sbr.rel (0) target = $region29
    $region28: #{tpu_custom_call.1} parent=1 // pred_region
      _
    $region29: #{tpu_custom_call.1} parent=1 // pred_fallthru
      _
    // Predicated region
    $region30: #{tpu_custom_call.1} parent=1 // pred_check
      _
    $region31: #{tpu_custom_call.1} parent=1 // pred_check_branch
      %39 = sbr.rel (0) target = $region33
    $region32: #{tpu_custom_call.1} parent=1 // pred_region
      _
    $region33: #{tpu_custom_call.1} parent=1 // pred_fallthru
      _
    // Predicated region
    $region34: #{tpu_custom_call.1} parent=1 // pred_check
      _
    $region35: #{tpu_custom_call.1} parent=1 // pred_check_branch
      %41 = sbr.rel (0) target = $region37
    $region36: #{tpu_custom_call.1} parent=1 // pred_region
      _
    $region37: #{tpu_custom_call.1} parent=1 // pred_fallthru
      _
    // Predicated region
    $region38: #{tpu_custom_call.1} parent=1 // pred_check
      _
    $region39: #{tpu_custom_call.1} parent=1 // pred_check_branch
      %43 = sbr.rel (0) target = $region41
    $region40: #{tpu_custom_call.1} parent=1 // pred_region
      %44 = dma.done [#allocation3], 128
    $region41: #{tpu_custom_call.1} parent=1 // pred_fallthru
      _
    %v45 = vld [vmem:[#allocation2] sm:$0xff]
    %v46 = vld [vmem:[%s1] sm:$0xff]
    %v47 = vld [vmem:[%s1 + $0x8] sm:$0xff]
    %v48 = vld [vmem:[%s1 + $0x10] sm:$0xff]
    %v49 = vld [vmem:[%s1 + $0x18] sm:$0xff]
    %v50 = vld [vmem:[%s2] sm:$0x1]
    %v52 = vlaneseq
    %v53 = vshrl.u32 %v52, 7
    %v54 = vsub.s32 0, %v53
    %v55 = vrot.slane %v50, %v54
    %vm57 = vcmask 261120
    %v59 = vsel %vm57, %v45, 0
    %61 = vmatprep.subr.mxu0 0.0
    %62 = vmatpush1.msra.mxu0 %v46
    %63 = vmatprep.subr.mxu0 0.0
    %64 = vmatpush1.msra.mxu0 %v47
    %65 = vmatprep.subr.mxu0 0.0
    %66 = vmatpush1.msra.mxu0 %v48
    %67 = vmatprep.subr.mxu0 0.0
    %68 = vmatpush1.msra.mxu0 %v49
    %69 = vmatprep.subr.mxu0 0.0
    %70 = vmatpush1.msra.mxu0 0.0
    %71 = vmatprep.subr.mxu0 0.0
    %72 = vmatpush1.msra.mxu0 0.0
    %73 = vmatprep.subr.mxu0 0.0
    %74 = vmatpush1.msra.mxu0 0.0
    %75 = vmatprep.subr.mxu0 0.0
    %76 = vmatpush1.msra.mxu0 0.0
    %77 = vmatprep.subr.mxu0 0.0
    %78 = vmatpush1.msra.mxu0 0.0
    %79 = vmatprep.subr.mxu0 0.0
    %80 = vmatpush1.msra.mxu0 0.0
    %81 = vmatprep.subr.mxu0 0.0
    %82 = vmatpush1.msra.mxu0 0.0
    %83 = vmatprep.subr.mxu0 0.0
    %84 = vmatpush1.msra.mxu0 0.0
    %85 = vmatprep.subr.mxu0 0.0
    %86 = vmatpush1.msra.mxu0 0.0
    %87 = vmatprep.subr.mxu0 0.0
    %88 = vmatpush1.msra.mxu0 0.0
    %89 = vmatprep.subr.mxu0 0.0
    %90 = vmatpush1.msra.mxu0 0.0
    %91 = vmatprep.subr.mxu0 0.0
    %92 = vmatpush1.msra.mxu0 0.0
    %93 = vmatprep.subr.mxu0 0.0
    %94 = vmatpush1.msra.mxu0 0.0
    %95 = vmatprep.subr.mxu0 0.0
    %96 = vmatpush1.msra.mxu0 0.0
    %97 = vmatprep.subr.mxu0 0.0
    %98 = vmatpush1.msra.mxu0 0.0
    %99 = vmatprep.subr.mxu0 0.0
    %100 = vmatpush1.msra.mxu0 0.0
    %101 = vmatprep.subr.mxu0 0.0
    %102 = vmatpush1.msra.mxu0 0.0
    %103 = vmatprep.subr.mxu0 0.0
    %104 = vmatpush1.msra.mxu0 0.0
    %105 = vmatprep.subr.mxu0 0.0
    %106 = vmatpush1.msra.mxu0 0.0
    %107 = vmatprep.subr.mxu0 0.0
    %108 = vmatpush1.msra.mxu0 0.0
    %109 = vmatprep.subr.mxu0 0.0
    %110 = vmatpush1.msra.mxu0 0.0
    %111 = vmatprep.subr.mxu0 0.0
    %112 = vmatpush1.msra.mxu0 0.0
    %113 = vmatprep.subr.mxu0 0.0
    %114 = vmatpush1.msra.mxu0 0.0
    %115 = vmatprep.subr.mxu0 0.0
    %116 = vmatpush1.msra.mxu0 0.0
    %117 = vmatprep.subr.mxu0 0.0
    %118 = vmatpush1.msra.mxu0 0.0
    %119 = vmatprep.subr.mxu0 0.0
    %120 = vmatpush1.msra.mxu0 0.0
    %121 = vmatprep.subr.mxu0 0.0
    %122 = vmatpush1.msra.mxu0 0.0
    %123 = vmatprep.subr.mxu0 0.0
    %124 = vmatpush1.msra.mxu0 0.0
    %125 = vmatprep.mubr.f32.mxu0 0.0
    %126 = vmatmul.mubr.f32.gmra.mrb[0].mxu0 %v59
    %v127 = vpop.f32.mrb[0].mxu0
    %v128 = vadd.f32 %v55, %v127
    %v129 = vpop.f32.mrb[0].mxu0
    %130 = vdwg.mxu0
    %v131 = vtanh.pop %v128
    %v132 = vld [vmem:[%s3] sm:$0xff]
    %v133 = vld [vmem:[%s3 + $0x8] sm:$0x7f]
    %v134 = vld [vmem:[%s4] sm:$0x1]
    %v136 = vlaneseq
    %v137 = vshrl.u32 %v136, 7
    %v138 = vsub.s32 0, %v137
    %v139 = vrot.slane %v134, %v138
    %vm141 = vcmask 121856
    %v143 = vsel %vm141, %v131, 0
    %vm145 = vcmask 1046528
    %v147 = vsel %vm145, %v133, 0
    %149 = vmatprep.subr.mxu0 0.0
    %150 = vmatpush1.msra.mxu0 %v132
    %151 = vmatprep.subr.mxu0 0.0
    %152 = vmatpush1.msra.mxu0 %v147
    %153 = vmatprep.subr.mxu0 0.0
    %154 = vmatpush1.msra.mxu0 0.0
    %155 = vmatprep.subr.mxu0 0.0
    %156 = vmatpush1.msra.mxu0 0.0
    %157 = vmatprep.subr.mxu0 0.0
    %158 = vmatpush1.msra.mxu0 0.0
    %159 = vmatprep.subr.mxu0 0.0
    %160 = vmatpush1.msra.mxu0 0.0
    %161 = vmatprep.subr.mxu0 0.0
    %162 = vmatpush1.msra.mxu0 0.0
    %163 = vmatprep.subr.mxu0 0.0
    %164 = vmatpush1.msra.mxu0 0.0
    %165 = vmatprep.subr.mxu0 0.0
    %166 = vmatpush1.msra.mxu0 0.0
    %167 = vmatprep.subr.mxu0 0.0
    %168 = vmatpush1.msra.mxu0 0.0
    %169 = vmatprep.subr.mxu0 0.0
    %170 = vmatpush1.msra.mxu0 0.0
    %171 = vmatprep.subr.mxu0 0.0
    %172 = vmatpush1.msra.mxu0 0.0
    %173 = vmatprep.subr.mxu0 0.0
    %174 = vmatpush1.msra.mxu0 0.0
    %175 = vmatprep.subr.mxu0 0.0
    %176 = vmatpush1.msra.mxu0 0.0
    %177 = vmatprep.subr.mxu0 0.0
    %178 = vmatpush1.msra.mxu0 0.0
    %179 = vmatprep.subr.mxu0 0.0
    %180 = vmatpush1.msra.mxu0 0.0
    %181 = vmatprep.subr.mxu0 0.0
    %182 = vmatpush1.msra.mxu0 0.0
    %183 = vmatprep.subr.mxu0 0.0
    %184 = vmatpush1.msra.mxu0 0.0
    %185 = vmatprep.subr.mxu0 0.0
    %186 = vmatpush1.msra.mxu0 0.0
    %187 = vmatprep.subr.mxu0 0.0
    %188 = vmatpush1.msra.mxu0 0.0
    %189 = vmatprep.subr.mxu0 0.0
    %190 = vmatpush1.msra.mxu0 0.0
    %191 = vmatprep.subr.mxu0 0.0
    %192 = vmatpush1.msra.mxu0 0.0
    %193 = vmatprep.subr.mxu0 0.0
    %194 = vmatpush1.msra.mxu0 0.0
    %195 = vmatprep.subr.mxu0 0.0
    %196 = vmatpush1.msra.mxu0 0.0
    %197 = vmatprep.subr.mxu0 0.0
    %198 = vmatpush1.msra.mxu0 0.0
    %199 = vmatprep.subr.mxu0 0.0
    %200 = vmatpush1.msra.mxu0 0.0
    %201 = vmatprep.subr.mxu0 0.0
    %202 = vmatpush1.msra.mxu0 0.0
    %203 = vmatprep.subr.mxu0 0.0
    %204 = vmatpush1.msra.mxu0 0.0
    %205 = vmatprep.subr.mxu0 0.0
    %206 = vmatpush1.msra.mxu0 0.0
    %207 = vmatprep.subr.mxu0 0.0
    %208 = vmatpush1.msra.mxu0 0.0
    %209 = vmatprep.subr.mxu0 0.0
    %210 = vmatpush1.msra.mxu0 0.0
    %211 = vmatprep.subr.mxu0 0.0
    %212 = vmatpush1.msra.mxu0 0.0
    %213 = vmatprep.mubr.f32.mxu0 0.0
    %214 = vmatmul.mubr.f32.gmra.mrb[0].mxu0 %v143
    %v215 = vpop.f32.mrb[0].mxu0
    %v216 = vadd.f32 %v139, %v215
    %v217 = vpop.f32.mrb[0].mxu0
    %218 = vdwg.mxu0
    %v219 = vtanh.pop %v216
    %v220 = vld [vmem:[%s5] sm:$0xff]
    %v221 = vld [vmem:[%s5 + $0x8] sm:$0x7f]
    %v222 = vld [vmem:[%s6] sm:$0x1]
    %v224 = vlaneseq
    %v225 = vshrl.u32 %v224, 7
    %v226 = vsub.s32 0, %v225
    %v227 = vrot.slane %v222, %v226
    %v230 = vsel %vm141, %v219, 0
    %v233 = vsel %vm145, %v221, 0
    %235 = vmatprep.subr.mxu0 0.0
    %236 = vmatpush1.msra.mxu0 %v220
    %237 = vmatprep.subr.mxu0 0.0
    %238 = vmatpush1.msra.mxu0 %v233
    %239 = vmatprep.subr.mxu0 0.0
    %240 = vmatpush1.msra.mxu0 0.0
    %241 = vmatprep.subr.mxu0 0.0
    %242 = vmatpush1.msra.mxu0 0.0
    %243 = vmatprep.subr.mxu0 0.0
    %244 = vmatpush1.msra.mxu0 0.0
    %245 = vmatprep.subr.mxu0 0.0
    %246 = vmatpush1.msra.mxu0 0.0
    %247 = vmatprep.subr.mxu0 0.0
    %248 = vmatpush1.msra.mxu0 0.0
    %249 = vmatprep.subr.mxu0 0.0
    %250 = vmatpush1.msra.mxu0 0.0
    %251 = vmatprep.subr.mxu0 0.0
    %252 = vmatpush1.msra.mxu0 0.0
    %253 = vmatprep.subr.mxu0 0.0
    %254 = vmatpush1.msra.mxu0 0.0
    %255 = vmatprep.subr.mxu0 0.0
    %256 = vmatpush1.msra.mxu0 0.0
    %257 = vmatprep.subr.mxu0 0.0
    %258 = vmatpush1.msra.mxu0 0.0
    %259 = vmatprep.subr.mxu0 0.0
    %260 = vmatpush1.msra.mxu0 0.0
    %261 = vmatprep.subr.mxu0 0.0
    %262 = vmatpush1.msra.mxu0 0.0
    %263 = vmatprep.subr.mxu0 0.0
    %264 = vmatpush1.msra.mxu0 0.0
    %265 = vmatprep.subr.mxu0 0.0
    %266 = vmatpush1.msra.mxu0 0.0
    %267 = vmatprep.subr.mxu0 0.0
    %268 = vmatpush1.msra.mxu0 0.0
    %269 = vmatprep.subr.mxu0 0.0
    %270 = vmatpush1.msra.mxu0 0.0
    %271 = vmatprep.subr.mxu0 0.0
    %272 = vmatpush1.msra.mxu0 0.0
    %273 = vmatprep.subr.mxu0 0.0
    %274 = vmatpush1.msra.mxu0 0.0
    %275 = vmatprep.subr.mxu0 0.0
    %276 = vmatpush1.msra.mxu0 0.0
    %277 = vmatprep.subr.mxu0 0.0
    %278 = vmatpush1.msra.mxu0 0.0
    %279 = vmatprep.subr.mxu0 0.0
    %280 = vmatpush1.msra.mxu0 0.0
    %281 = vmatprep.subr.mxu0 0.0
    %282 = vmatpush1.msra.mxu0 0.0
    %283 = vmatprep.subr.mxu0 0.0
    %284 = vmatpush1.msra.mxu0 0.0
    %285 = vmatprep.subr.mxu0 0.0
    %286 = vmatpush1.msra.mxu0 0.0
    %287 = vmatprep.subr.mxu0 0.0
    %288 = vmatpush1.msra.mxu0 0.0
    %289 = vmatprep.subr.mxu0 0.0
    %290 = vmatpush1.msra.mxu0 0.0
    %291 = vmatprep.subr.mxu0 0.0
    %292 = vmatpush1.msra.mxu0 0.0
    %293 = vmatprep.subr.mxu0 0.0
    %294 = vmatpush1.msra.mxu0 0.0
    %295 = vmatprep.subr.mxu0 0.0
    %296 = vmatpush1.msra.mxu0 0.0
    %297 = vmatprep.subr.mxu0 0.0
    %298 = vmatpush1.msra.mxu0 0.0
    %299 = vmatprep.mubr.f32.mxu0 0.0
    %300 = vmatmul.mubr.f32.gmra.mrb[0].mxu0 %v230
    %v301 = vpop.f32.mrb[0].mxu0
    %v302 = vadd.f32 %v227, %v301
    %v303 = vpop.f32.mrb[0].mxu0
    %304 = vdwg.mxu0
    %v305 = vtanh.pop %v302
    %v306 = vld [vmem:[%s7] sm:$0xff]
    %v307 = vld [vmem:[%s7 + $0x8] sm:$0x3]
    %v308 = vld [vmem:[%s8] sm:$0x1]
    %v310 = vlaneseq
    %v311 = vshrl.u32 %v310, 7
    %v312 = vsub.s32 0, %v311
    %v313 = vrot.slane %v308, %v312
    %vm315 = vcmask 80896
    %v317 = vsel %vm315, %v305, 0
    %vm319 = vcmask 1041408
    %v321 = vsel %vm319, %v307, 0
    %323 = vmatprep.subr.mxu0 0.0
    %324 = vmatpush1.msra.mxu0 %v306
    %325 = vmatprep.subr.mxu0 0.0
    %326 = vmatpush1.msra.mxu0 %v321
    %327 = vmatprep.subr.mxu0 0.0
    %328 = vmatpush1.msra.mxu0 0.0
    %329 = vmatprep.subr.mxu0 0.0
    %330 = vmatpush1.msra.mxu0 0.0
    %331 = vmatprep.subr.mxu0 0.0
    %332 = vmatpush1.msra.mxu0 0.0
    %333 = vmatprep.subr.mxu0 0.0
    %334 = vmatpush1.msra.mxu0 0.0
    %335 = vmatprep.subr.mxu0 0.0
    %336 = vmatpush1.msra.mxu0 0.0
    %337 = vmatprep.subr.mxu0 0.0
    %338 = vmatpush1.msra.mxu0 0.0
    %339 = vmatprep.subr.mxu0 0.0
    %340 = vmatpush1.msra.mxu0 0.0
    %341 = vmatprep.subr.mxu0 0.0
    %342 = vmatpush1.msra.mxu0 0.0
    %343 = vmatprep.subr.mxu0 0.0
    %344 = vmatpush1.msra.mxu0 0.0
    %345 = vmatprep.subr.mxu0 0.0
    %346 = vmatpush1.msra.mxu0 0.0
    %347 = vmatprep.subr.mxu0 0.0
    %348 = vmatpush1.msra.mxu0 0.0
    %349 = vmatprep.subr.mxu0 0.0
    %350 = vmatpush1.msra.mxu0 0.0
    %351 = vmatprep.subr.mxu0 0.0
    %352 = vmatpush1.msra.mxu0 0.0
    %353 = vmatprep.subr.mxu0 0.0
    %354 = vmatpush1.msra.mxu0 0.0
    %355 = vmatprep.subr.mxu0 0.0
    %356 = vmatpush1.msra.mxu0 0.0
    %357 = vmatprep.subr.mxu0 0.0
    %358 = vmatpush1.msra.mxu0 0.0
    %359 = vmatprep.subr.mxu0 0.0
    %360 = vmatpush1.msra.mxu0 0.0
    %361 = vmatprep.subr.mxu0 0.0
    %362 = vmatpush1.msra.mxu0 0.0
    %363 = vmatprep.subr.mxu0 0.0
    %364 = vmatpush1.msra.mxu0 0.0
    %365 = vmatprep.subr.mxu0 0.0
    %366 = vmatpush1.msra.mxu0 0.0
    %367 = vmatprep.subr.mxu0 0.0
    %368 = vmatpush1.msra.mxu0 0.0
    %369 = vmatprep.subr.mxu0 0.0
    %370 = vmatpush1.msra.mxu0 0.0
    %371 = vmatprep.subr.mxu0 0.0
    %372 = vmatpush1.msra.mxu0 0.0
    %373 = vmatprep.subr.mxu0 0.0
    %374 = vmatpush1.msra.mxu0 0.0
    %375 = vmatprep.subr.mxu0 0.0
    %376 = vmatpush1.msra.mxu0 0.0
    %377 = vmatprep.subr.mxu0 0.0
    %378 = vmatpush1.msra.mxu0 0.0
    %379 = vmatprep.subr.mxu0 0.0
    %380 = vmatpush1.msra.mxu0 0.0
    %381 = vmatprep.subr.mxu0 0.0
    %382 = vmatpush1.msra.mxu0 0.0
    %383 = vmatprep.subr.mxu0 0.0
    %384 = vmatpush1.msra.mxu0 0.0
    %385 = vmatprep.subr.mxu0 0.0
    %386 = vmatpush1.msra.mxu0 0.0
    %387 = vmatprep.mubr.f32.mxu0 0.0
    %388 = vmatmul.mubr.f32.gmra.mrb[0].mxu0 %v317
    %v389 = vpop.f32.mrb[0].mxu0
    %v390 = vadd.f32 %v313, %v389
    %v391 = vpop.f32.mrb[0].mxu0
    %392 = vdwg.mxu0
    %393 = vst.msk [vmem:[#allocation5] sm:$0xff] %vm315, %v390
    // Predicated region
    $region42: #{tpu_custom_call.1} parent=1 // pred_check
      _
    $region43: #{tpu_custom_call.1} parent=1 // pred_check_branch
      %395 = sbr.rel (0) target = $region45
    $region44: #{tpu_custom_call.1} parent=1 // pred_region
      %s397 = ssub.s32 128, 128
      %398 = vsyncadd [#allocation4], %s397
      %s400 = sshll.u32 [#allocation5], 4
      %s401 = int_to_ptr.vmem [resolvable:$true] %s400
      %403 = dma.vmem_to_hbm [thread:$0]  %s401, 128, %s9, [#allocation4]
    $region45: #{tpu_custom_call.1} parent=1 // pred_fallthru
      _
    // Predicated region
    $region46: #{tpu_custom_call.1} parent=1 // pred_check
      _
    $region47: #{tpu_custom_call.1} parent=1 // pred_check_branch
      %405 = sbr.rel (0) target = $region49
    $region48: #{tpu_custom_call.1} parent=1 // pred_region
      %406 = dma.done [#allocation4], 128
    $region49: #{tpu_custom_call.1} parent=1 // pred_fallthru
      _
    %407 = vsyncpa [#allocation3], 1
    %408 = vsyncpa [#allocation4], 1

</llo_original>
